<compile_context>
chip_gen: v6e
topology: v6e:2x2x1
jax: 0.10.0
libtpu: 0.0.40
codegen_flags: <defaults>
</compile_context>

<pallas_src>
import jax
import jax.numpy as jnp
from jax.experimental import pallas as pl
from jax.experimental.pallas import tpu as pltpu


def _pos_enc_kernel(x_ref, o_ref):
    # x_ref: (tb, c, tl)   o_ref: (tb, c + 1, tl)
    tb, c, tl = x_ref.shape
    j = pl.program_id(1)  # L-tile index -> element offset j * tl
    # Positions for this L-tile. Note: cast to x.dtype (exact for f32 up to l < 2^24).
    pos = (j * tl + jax.lax.broadcasted_iota(jnp.int32, (tb, 1, tl), 2)).astype(o_ref.dtype)
    # Two direct slice stores (both lane-dense over the full tl) instead of a
    # sublane-axis concatenate, which would materialize an extra (c+1, tl)
    # temporary before the store.
    o_ref[:, :c, :] = x_ref[...]
    o_ref[:, c:, :] = pos


def _vmem_capacity_bytes():
    """Per-core VMEM capacity; conservative (v7x-sized) default if the query fails."""
    try:
        info = pltpu.get_tpu_info()
        cap = getattr(info, "vmem_capacity_bytes", None)
        if cap:
            return int(cap)
    except Exception:
        pass
    return 64 * 1024 * 1024


def _choose_tiles(b, c, l, itemsize, tile_b=None, tile_l=None):
    """Pick (tb, tl) batch/lane tile sizes.

    Budget: the double-buffered input + output tiles,
        2 * tb * tl * (c + (c + 1)) * itemsize,
    kept <= min(VMEM/2, 32 MiB) — safe on v5e/v6e (128 MiB) and v7x (64 MiB).
    """
    if tile_b is not None or tile_l is not None:
        tb = b if tile_b is None else max(1, min(int(tile_b), b))
        tl = l if tile_l is None else max(1, min(int(tile_l), l))
        if tl < l:
            tl = max(128, (tl // 128) * 128)  # tiled: last block dim % 128 == 0
            if tl >= l:
                tl = l
        return tb, tl

    budget = min(_vmem_capacity_bytes() // 2, 32 * 1024 * 1024)
    bytes_per_elem = 2 * (2 * c + 1) * itemsize       # in + out, double-buffered, per (batch, lane) elem
    max_elems = max(1, budget // bytes_per_elem)      # max tb * tl

    # Lane tile: full extent when it fits, else the largest multiple of 128 that does
    # (measured streaming data: >= 512 lanes needed for ~85% of HBM roofline).
    if l <= max_elems:
        tl = l
    else:
        tl = max(128, (max_elems // 128) * 128)

    # Batch tile: fill the remaining budget.
    tb = int(max(1, min(b, max_elems // tl)))

    # v7x megacore: keep >= 2 parallel grid blocks when there is work to split;
    # a single-step grid pins the whole memcpy to one TensorCore.
    if pl.cdiv(b, tb) * pl.cdiv(l, tl) < 2:
        if b >= 2:
            tb = pl.cdiv(b, 2)
        elif l > 128:
            tl = max(128, ((l // 2) // 128) * 128)

    return tb, tl


def positional_encoding(x, *, tile_b=None, tile_l=None):
    """x: (b, c, l) -> (b, c+1, l): append an arange(l) positional channel."""
    b, c, l = x.shape
    itemsize = jnp.dtype(x.dtype).itemsize
    total_out_bytes = b * (c + 1) * l * itemsize

    if tile_b is None and tile_l is None and (l < 128 or total_out_bytes < 256 * 1024):
        # Small-shape fallback: single un-gridded full block (launch overhead dominates).
        tb, tl = b, l
    else:
        tb, tl = _choose_tiles(b, c, l, itemsize, tile_b=tile_b, tile_l=tile_l)

    grid = (pl.cdiv(b, tb), pl.cdiv(l, tl))

    # Explicit VMEM limit sized to the chosen (double-buffered) tiles, with headroom,
    # and capped well under physical VMEM on every generation.
    needed = 2 * tb * tl * (2 * c + 1) * itemsize
    vmem_limit = int(min(max(needed + (4 << 20), 16 << 20), _vmem_capacity_bytes() * 3 // 4))

    out_shape = jax.ShapeDtypeStruct((b, c + 1, l), x.dtype)
    return pl.pallas_call(
        _pos_enc_kernel,
        out_shape=out_shape,
        grid=grid,
        in_specs=[pl.BlockSpec((tb, c, tl), lambda i, j: (i, 0, j))],
        out_specs=pl.BlockSpec((tb, c + 1, tl), lambda i, j: (i, 0, j)),
        compiler_params=pltpu.CompilerParams(
            # Both axes are independent: lets Mosaic shard the copy across both
            # TensorCores on v7x; harmless/neutral on v5e/v6e.
            dimension_semantics=("parallel", "parallel"),
            vmem_limit_bytes=vmem_limit,
        ),
    )(x)


def positional_encoding_ref(x):
    b, c, l = x.shape
    pos = jnp.broadcast_to(jnp.arange(l, dtype=x.dtype).reshape(1, 1, l), (b, 1, l))
    return jnp.concatenate((x, pos), axis=1)


if __name__ == "__main__":
    key = jax.random.PRNGKey(0)

    # 1) Small shape matching the module's typical use -> single full-block path.
    b, c, l = 2, 4, 16
    x = jax.random.normal(key, (b, c, l), dtype=jnp.float32)
    out = jax.block_until_ready(positional_encoding(x))
    ref = positional_encoding_ref(x)
    assert out.shape == (b, c + 1, l), out.shape
    assert out.dtype == jnp.float32
    assert jnp.allclose(out, ref), "mismatch vs reference (small / single-block path)"

    # 2) Forced batch + lane tiling: multi-block grid in both axes, padded last L-tile.
    b2, c2, l2 = 4, 4, 640
    x2 = jax.random.normal(jax.random.PRNGKey(0), (b2, c2, l2), dtype=jnp.float32)
    out2 = jax.block_until_ready(positional_encoding(x2, tile_b=2, tile_l=256))
    assert out2.shape == (b2, c2 + 1, l2), out2.shape
    assert jnp.allclose(out2, positional_encoding_ref(x2)), "mismatch vs reference (tiled path)"

    # 3) Auto tile-chooser path (large enough to skip the small-shape fallback).
    b3, c3, l3 = 2, 4, 8192
    x3 = jax.random.normal(jax.random.PRNGKey(0), (b3, c3, l3), dtype=jnp.float32)
    out3 = jax.block_until_ready(positional_encoding(x3))
    assert out3.shape == (b3, c3 + 1, l3), out3.shape
    assert jnp.allclose(out3, positional_encoding_ref(x3)), "mismatch vs reference (auto path)"

    print("KERNEL_OK")
</pallas_src>

<mosaic_0001>
module attributes {stable_mosaic.version = 11 : i64} {
  func.func @_pos_enc_kernel(%arg0: i32, %arg1: i32, %arg2: memref<2x4x16xf32, #tpu.memory_space<vmem>>, %arg3: memref<2x5x16xf32, #tpu.memory_space<vmem>>) attributes {dimension_semantics = [#tpu.dimension_semantics<parallel>, #tpu.dimension_semantics<parallel>], iteration_bounds = array<i64: 1, 1>, scalar_prefetch = 0 : i64, scratch_operands = 0 : i64, tpu.core_type = #tpu.core_type<tc>, window_params = [{transform_indices = @transform_0, window_bounds = array<i64: 2, 4, 16>}, {transform_indices = @transform_1, window_bounds = array<i64: 2, 5, 16>}]} {
    %c16_i32 = arith.constant 16 : i32
    %0 = arith.muli %arg1, %c16_i32 : i32
    %1 = tpu.iota {dimensions = array<i32: 2>} : vector<2x1x16xi32>
    %2 = vector.broadcast %0 : i32 to vector<2x1x16xi32>
    %3 = arith.addi %2, %1 : vector<2x1x16xi32>
    %4 = arith.sitofp %3 : vector<2x1x16xi32> to vector<2x1x16xf32>
    %c0 = arith.constant 0 : index
    %c0_0 = arith.constant 0 : index
    %c0_1 = arith.constant 0 : index
    %5 = vector.load %arg2[%c0, %c0_0, %c0_1] : memref<2x4x16xf32, #tpu.memory_space<vmem>>, vector<2x4x16xf32>
    %c0_2 = arith.constant 0 : index
    %c0_3 = arith.constant 0 : index
    %c0_4 = arith.constant 0 : index
    %6 = vector.load %arg3[%c0_2, %c0_3, %c0_4] : memref<2x5x16xf32, #tpu.memory_space<vmem>>, vector<2x4x16xf32>
    tpu.vector_store %arg3[%c0_2, %c0_3, %c0_4], %5 {strides = array<i32>} : memref<2x5x16xf32, #tpu.memory_space<vmem>>, vector<2x4x16xf32>,
    %c0_5 = arith.constant 0 : index
    %c4 = arith.constant 4 : index
    %c0_6 = arith.constant 0 : index
    %7 = vector.load %arg3[%c0_5, %c4, %c0_6] : memref<2x5x16xf32, #tpu.memory_space<vmem>>, vector<2x1x16xf32>
    tpu.vector_store %arg3[%c0_5, %c4, %c0_6], %4 {strides = array<i32>} : memref<2x5x16xf32, #tpu.memory_space<vmem>>, vector<2x1x16xf32>,
    return
  }
  func.func @transform_0(%arg0: i32, %arg1: i32) -> (i32, i32, i32) {
    %c0_i32 = arith.constant 0 : i32
    %c0_i32_0 = arith.constant 0 : i32
    return %arg0, %c0_i32, %arg1 : i32, i32, i32
  }
  func.func @transform_1(%arg0: i32, %arg1: i32) -> (i32, i32, i32) {
    %c0_i32 = arith.constant 0 : i32
    %c0_i32_0 = arith.constant 0 : i32
    return %arg0, %c0_i32, %arg1 : i32, i32, i32
  }
}

</mosaic_0001>

<llo_original>
// kernel: tpu_custom_call.1
$region0: #{tpu_custom_call.1}
  #allocation0 [shape = 'u32[]', space=smem, size = 0x4, offset = 0x4, fixed_abs, tag = 'smem constant byte address 0x4 - core index']
  #allocation1 [shape = 'u32[144,128]{1,0:T(1,128)}', space=vmem, size = 0x12000, scoped, tag = 'internal scratch']
  %s0 = inlined_call_operand.hbm [shape: f32[2,4,16], index: 0, kind: input, shape index: {}]
  %s1 = inlined_call_operand.vmem [shape: f32[2,5,16], index: 1, kind: output, shape index: {}]
  %s2 = sld [smem:[#allocation0]]
  $region18: #{tpu_custom_call.1} parent=0
    _
  %s4 = ssub.s32 1, %s2
  %s5 = scalar_select 0, %s4, %s2
  $region1: #{tpu_custom_call.1} parent=0
    #allocation2 [shape = 'u8[4096]{0}', space=vmem, size = 0x1000, scoped, tag = 'input window, operand 0, single buffered']
    #allocation3 [shape = 's32[1]{0}', space=sflag, size = 0x4, scoped, tag = 'scoped memory for tpu_custom_call.1']
    %6 = vsyncpa [#allocation3], 0
    // Predicated region
    $region2: #{tpu_custom_call.1} parent=1 // pred_check
      _
    $region3: #{tpu_custom_call.1} parent=1 // pred_check_branch
      %8 = sbr.rel (0) target = $region5
    $region4: #{tpu_custom_call.1} parent=1 // pred_region
      %s10 = ssub.s32 128, 128
      %11 = vsyncadd [#allocation3], %s10
      %s12 = sshll.u32 [#allocation2], 4
      %s13 = int_to_ptr.vmem [resolvable:$true] %s12
      %18 = dma.hbm_to_vmem [thread:$0]  %s0, 128, %s13, [#allocation3], 64, 64, 4
    $region5: #{tpu_custom_call.1} parent=1 // pred_fallthru
      _
    // Predicated region
    $region6: #{tpu_custom_call.1} parent=1 // pred_check
      _
    $region7: #{tpu_custom_call.1} parent=1 // pred_check_branch
      %20 = sbr.rel (0) target = $region9
    $region8: #{tpu_custom_call.1} parent=1 // pred_region
      %21 = dma.done [#allocation3], 128
    $region9: #{tpu_custom_call.1} parent=1 // pred_fallthru
      _
    %s22 = smul.u32 0, 16
    %v23 = vlaneseq
    %v24 = vand.u32 %v23, 127
    %v25 = vstv %s22
    %v26 = vadd.s32 %v25, %v24
    %v27 = vcvt.s32.f32 %v26
    %v28 = vld [vmem:[#allocation2] sm:$0xf]
    %v29 = vld [vmem:[#allocation2 + $0x4] sm:$0xf]
    %vm30 = vcmask 125952
    %31 = vst.msk [vmem:[%s1] sm:$0xf] %vm30, %v28
    %32 = vst.msk [vmem:[%s1 + $0x8] sm:$0xf] %vm30, %v29
    %vm33 = vcmask 122880
    %34 = vst.msk [vmem:[%s1 + $0x4] sm:$0x1] %vm33, %v27
    %35 = vst.msk [vmem:[%s1 + $0xc] sm:$0x1] %vm33, %v27
    // Predicated region
    $region10: #{tpu_custom_call.1} parent=1 // pred_check
      _
    $region11: #{tpu_custom_call.1} parent=1 // pred_check_branch
      %37 = sbr.rel (0) target = $region13
    $region12: #{tpu_custom_call.1} parent=1 // pred_region
      _
    $region13: #{tpu_custom_call.1} parent=1 // pred_fallthru
      _
    // Predicated region
    $region14: #{tpu_custom_call.1} parent=1 // pred_check
      _
    $region15: #{tpu_custom_call.1} parent=1 // pred_check_branch
      %39 = sbr.rel (0) target = $region17
    $region16: #{tpu_custom_call.1} parent=1 // pred_region
      _
    $region17: #{tpu_custom_call.1} parent=1 // pred_fallthru
      _
    %40 = vsyncpa [#allocation3], 1

</llo_original>
